<compile_context>
chip_gen: v7x
topology: tpu7x:2x2x1
jax: 0.10.0
libtpu: 0.0.40
codegen_flags: <defaults>
</compile_context>

<pallas_src>
import jax
import jax.numpy as jnp
from jax.experimental import pallas as pl
from jax.experimental.pallas import tpu as pltpu


def planar_kernel(scalars_ref, x_ref, w_ref, u_ref, z_ref, ld_ref):
    b = scalars_ref[0]                 # scalar from SMEM
    uw = scalars_ref[1]                # scalar u . w (precomputed in wrapper)

    x = x_ref[...]                     # (tn, D) f32
    w = w_ref[...]                     # (1, D) f32, VMEM-resident
    u = u_ref[...]                     # (1, D) f32, VMEM-resident

    # affine = x @ w.T + b  -> lane-axis reduce, shape (tn, 1)
    affine = jnp.sum(x * w, axis=1, keepdims=True) + b
    t = jnp.tanh(affine)               # (tn, 1)

    # z = x + u * tanh(w x + b)
    z_ref[...] = (x + u * t).astype(z_ref.dtype)

    # det = 1 + (1 - t^2) * (u . w)   (psi never materialized)
    det = 1.0 + (1.0 - t * t) * uw
    ld_ref[...] = jnp.log(1e-4 + jnp.abs(det)).astype(ld_ref.dtype)


def _choose_tile_n(n, d, itemsize,
                   target_tile_bytes=4 << 20,    # ~4 MiB per x tile
                   min_tile_bytes=512 << 10,     # keep per-step DMA >= 512 KiB
                   min_steps=16):                # >= ~8 steps per TC on v7x
    """D-aware tile size: biggest multiple-of-8 row count within the byte budget."""
    row_bytes = d * itemsize
    rows = max(8, (target_tile_bytes // row_bytes) // 8 * 8)
    if n <= rows:
        return n                                  # single full-extent block
    steps = -(-n // rows)
    if steps < min_steps:
        rows_for_steps = ((-(-n // min_steps) + 7) // 8) * 8
        min_rows = max(8, (min_tile_bytes // row_bytes) // 8 * 8)
        rows = min(rows, max(rows_for_steps, min_rows))
    return max(rows, 8)


def planar_forward(x, w, u, b, *, tile_n=None):
    """x: (N, D); w, u: (1, D); b: scalar-like. Returns (z: (N, D), log_det: (N,))."""
    N, D = x.shape
    w = jnp.asarray(w, x.dtype).reshape(1, D)
    u = jnp.asarray(u, x.dtype).reshape(1, D)

    # Scalars through SMEM: b and the hoisted u . w.
    b_s = jnp.asarray(b, jnp.float32).reshape(())
    uw = jnp.sum(u.astype(jnp.float32) * w.astype(jnp.float32))
    scalars = jnp.stack([b_s, uw])                # (2,) f32

    if tile_n is None:
        tn = _choose_tile_n(N, D, jnp.dtype(x.dtype).itemsize)
    else:
        tn = min(int(tile_n), N)
        if tn < N:
            assert tn % 8 == 0, "tile_n must be a multiple of 8 (sublane tiling)"

    grid = (pl.cdiv(N, tn),)   # no padding: ragged last block is masked by Pallas

    z, ld = pl.pallas_call(
        planar_kernel,
        out_shape=(
            jax.ShapeDtypeStruct((N, D), x.dtype),
            jax.ShapeDtypeStruct((N, 1), jnp.float32),
        ),
        grid=grid,
        in_specs=[
            pl.BlockSpec(memory_space=pltpu.MemorySpace.SMEM),   # [b, u.w] scalars
            pl.BlockSpec((tn, D), lambda i: (i, 0)),             # x tile
            pl.BlockSpec((1, D), lambda i: (0, 0)),              # w (resident)
            pl.BlockSpec((1, D), lambda i: (0, 0)),              # u (resident)
        ],
        out_specs=(
            pl.BlockSpec((tn, D), lambda i: (i, 0)),             # z tile
            pl.BlockSpec((tn, 1), lambda i: (i, 0)),             # log_det column
        ),
        compiler_params=pltpu.CompilerParams(
            dimension_semantics=("parallel",),
            # ~4 MiB x tiles double-buffered for x and z => ~17 MiB working set;
            # 32 MiB is safe on every generation (v7x physical VMEM = 64 MiB).
            vmem_limit_bytes=32 << 20,
        ),
    )(scalars, x, w, u)

    # torch: log_det = log(1e-4 + abs_det).squeeze(0) -> shape (N,)
    return z, ld[:, 0]


def planar_reference(x, w, u, b):
    b_s = jnp.asarray(b, jnp.float32).reshape(())
    affine = x @ w.T + b_s                     # (N, 1)
    t = jnp.tanh(affine)
    z = x + u * t
    psi = (1.0 - t ** 2) * w                   # (N, D)
    abs_det = jnp.abs(1.0 + psi @ u[0])        # (N,)
    log_det = jnp.log(1e-4 + abs_det)
    return z, log_det


if __name__ == "__main__":
    key = jax.random.PRNGKey(0)
    kx, kw, ku, kb = jax.random.split(key, 4)

    # Case 1: small hidden dim, single auto-sized block (no padding, no slicing).
    N1, D1 = 128, 32
    x1 = jax.random.normal(kx, (N1, D1), dtype=jnp.float32)
    w1 = 0.1 * jax.random.normal(kw, (1, D1), dtype=jnp.float32)
    u1 = 0.1 * jax.random.normal(ku, (1, D1), dtype=jnp.float32)
    b1 = 0.1 * jax.random.normal(kb, (1,), dtype=jnp.float32)

    z1, ld1 = planar_forward(x1, w1, u1, b1)
    jax.block_until_ready((z1, ld1))
    z1_ref, ld1_ref = planar_reference(x1, w1, u1, b1)
    assert z1.shape == (N1, D1) and ld1.shape == (N1,)
    assert jnp.allclose(z1, z1_ref, atol=1e-5, rtol=1e-5)
    assert jnp.allclose(ld1, ld1_ref, atol=1e-5, rtol=1e-5)

    # Case 2: lane-dense D, explicit small tile to exercise the multi-step grid
    # and the masked ragged last block (300 = 4*64 + 44), still no wrapper pad.
    N2, D2 = 300, 128
    x2 = jax.random.normal(kx, (N2, D2), dtype=jnp.float32)
    w2 = 0.1 * jax.random.normal(kw, (1, D2), dtype=jnp.float32)
    u2 = 0.1 * jax.random.normal(ku, (1, D2), dtype=jnp.float32)
    b2 = 0.1 * jax.random.normal(kb, (1,), dtype=jnp.float32)

    z2, ld2 = planar_forward(x2, w2, u2, b2, tile_n=64)   # grid = (5,)
    jax.block_until_ready((z2, ld2))
    z2_ref, ld2_ref = planar_reference(x2, w2, u2, b2)
    assert z2.shape == (N2, D2) and ld2.shape == (N2,)
    assert jnp.allclose(z2, z2_ref, atol=1e-5, rtol=1e-5)
    assert jnp.allclose(ld2, ld2_ref, atol=1e-5, rtol=1e-5)

    # TODO(synk): Planar.inverse uses autograd-based Newton iteration with
    # host-side per-sample control flow; not a kernel-side op, omitted.
    print("KERNEL_OK")
</pallas_src>

<mosaic_0001>
module attributes {stable_mosaic.version = 11 : i64} {
  func.func @planar_kernel(%arg0: i32, %arg1: memref<2xf32, #tpu.memory_space<smem>>, %arg2: memref<128x32xf32, #tpu.memory_space<vmem>>, %arg3: memref<1x32xf32, #tpu.memory_space<vmem>>, %arg4: memref<1x32xf32, #tpu.memory_space<vmem>>, %arg5: memref<128x32xf32, #tpu.memory_space<vmem>>, %arg6: memref<128x1xf32, #tpu.memory_space<vmem>>) attributes {dimension_semantics = [#tpu.dimension_semantics<parallel>], iteration_bounds = array<i64: 1>, scalar_prefetch = 0 : i64, scratch_operands = 0 : i64, tpu.core_type = #tpu.core_type<tc>, window_params = [{transform_indices = @transform_0, window_bounds = array<i64: 2>}, {transform_indices = @transform_1, window_bounds = array<i64: 128, 32>}, {pipeline_mode = #tpu.pipeline_mode<synchronous>, transform_indices = @transform_2, window_bounds = array<i64: 1, 32>}, {pipeline_mode = #tpu.pipeline_mode<synchronous>, transform_indices = @transform_3, window_bounds = array<i64: 1, 32>}, {transform_indices = @transform_4, window_bounds = array<i64: 128, 32>}, {transform_indices = @transform_5, window_bounds = array<i64: 128, 1>}]} {
    %c0 = arith.constant 0 : index
    %0 = memref.load %arg1[%c0] : memref<2xf32, #tpu.memory_space<smem>>
    %c1 = arith.constant 1 : index
    %1 = memref.load %arg1[%c1] : memref<2xf32, #tpu.memory_space<smem>>
    %c0_0 = arith.constant 0 : index
    %c0_1 = arith.constant 0 : index
    %2 = vector.load %arg2[%c0_0, %c0_1] : memref<128x32xf32, #tpu.memory_space<vmem>>, vector<128x32xf32>
    %c0_2 = arith.constant 0 : index
    %c0_3 = arith.constant 0 : index
    %3 = vector.load %arg3[%c0_2, %c0_3] : memref<1x32xf32, #tpu.memory_space<vmem>>, vector<1x32xf32>
    %c0_4 = arith.constant 0 : index
    %c0_5 = arith.constant 0 : index
    %4 = vector.load %arg4[%c0_4, %c0_5] : memref<1x32xf32, #tpu.memory_space<vmem>>, vector<1x32xf32>
    %5 = vector.broadcast %3 : vector<1x32xf32> to vector<128x32xf32>
    %6 = arith.mulf %2, %5 : vector<128x32xf32>
    %cst = arith.constant dense<0.000000e+00> : vector<128xf32>
    %7 = vector.multi_reduction <add>, %6, %cst [1] : vector<128x32xf32> to vector<128xf32>
    %8 = vector.shape_cast %7 : vector<128xf32> to vector<128x1xf32>
    %9 = vector.broadcast %0 : f32 to vector<128x1xf32>
    %10 = arith.addf %8, %9 : vector<128x1xf32>
    %11 = math.tanh %10 : vector<128x1xf32>
    %12 = vector.broadcast %4 : vector<1x32xf32> to vector<128x32xf32>
    %13 = vector.broadcast %11 : vector<128x1xf32> to vector<128x32xf32>
    %14 = arith.mulf %12, %13 : vector<128x32xf32>
    %15 = arith.addf %2, %14 : vector<128x32xf32>
    %c0_6 = arith.constant 0 : index
    %c0_7 = arith.constant 0 : index
    %16 = vector.load %arg5[%c0_6, %c0_7] : memref<128x32xf32, #tpu.memory_space<vmem>>, vector<128x32xf32>
    tpu.vector_store %arg5[%c0_6, %c0_7], %15 {strides = array<i32>} : memref<128x32xf32, #tpu.memory_space<vmem>>, vector<128x32xf32>,
    %17 = arith.mulf %11, %11 : vector<128x1xf32>
    %cst_8 = arith.constant 1.000000e+00 : f32
    %18 = vector.broadcast %cst_8 : f32 to vector<128x1xf32>
    %19 = arith.subf %18, %17 : vector<128x1xf32>
    %20 = vector.broadcast %1 : f32 to vector<128x1xf32>
    %21 = arith.mulf %19, %20 : vector<128x1xf32>
    %cst_9 = arith.constant 1.000000e+00 : f32
    %22 = vector.broadcast %cst_9 : f32 to vector<128x1xf32>
    %23 = arith.addf %22, %21 : vector<128x1xf32>
    %24 = math.absf %23 : vector<128x1xf32>
    %cst_10 = arith.constant 9.99999974E-5 : f32
    %25 = vector.broadcast %cst_10 : f32 to vector<128x1xf32>
    %26 = arith.addf %25, %24 : vector<128x1xf32>
    %27 = math.log %26 : vector<128x1xf32>
    %c0_11 = arith.constant 0 : index
    %c0_12 = arith.constant 0 : index
    %28 = vector.load %arg6[%c0_11, %c0_12] : memref<128x1xf32, #tpu.memory_space<vmem>>, vector<128x1xf32>
    tpu.vector_store %arg6[%c0_11, %c0_12], %27 {strides = array<i32>} : memref<128x1xf32, #tpu.memory_space<vmem>>, vector<128x1xf32>,
    return
  }
  func.func @transform_0(%arg0: i32) -> i32 {
    %c0_i32 = arith.constant 0 : i32
    %c0_i32_0 = arith.constant 0 : i32
    return %c0_i32 : i32
  }
  func.func @transform_1(%arg0: i32) -> (i32, i32) {
    %c0_i32 = arith.constant 0 : i32
    %c0_i32_0 = arith.constant 0 : i32
    return %arg0, %c0_i32 : i32, i32
  }
  func.func @transform_2(%arg0: i32) -> (i32, i32) {
    %c0_i32 = arith.constant 0 : i32
    %c0_i32_0 = arith.constant 0 : i32
    %c0_i32_1 = arith.constant 0 : i32
    return %c0_i32, %c0_i32_0 : i32, i32
  }
  func.func @transform_3(%arg0: i32) -> (i32, i32) {
    %c0_i32 = arith.constant 0 : i32
    %c0_i32_0 = arith.constant 0 : i32
    %c0_i32_1 = arith.constant 0 : i32
    return %c0_i32, %c0_i32_0 : i32, i32
  }
  func.func @transform_4(%arg0: i32) -> (i32, i32) {
    %c0_i32 = arith.constant 0 : i32
    %c0_i32_0 = arith.constant 0 : i32
    return %arg0, %c0_i32 : i32, i32
  }
  func.func @transform_5(%arg0: i32) -> (i32, i32) {
    %c0_i32 = arith.constant 0 : i32
    %c0_i32_0 = arith.constant 0 : i32
    return %arg0, %c0_i32 : i32, i32
  }
}

</mosaic_0001>

<llo_original>
// kernel: tpu_custom_call.1
$region0: #{tpu_custom_call.1}
  #allocation0 [shape = 'u32[]', space=smem, size = 0x4, offset = 0x4, fixed_abs, tag = 'smem constant byte address 0x4 - core index']
  #allocation1 [shape = 'u32[144,128]{1,0:T(1,128)}', space=vmem, size = 0x12000, scoped, tag = 'internal scratch']
  %s0 = inlined_call_operand.vmem [shape: f32[2], index: 0, kind: input, shape index: {}]
  %s1 = inlined_call_operand.vmem [shape: f32[128,32], index: 1, kind: input, shape index: {}]
  %s2 = inlined_call_operand.vmem [shape: f32[1,32], index: 2, kind: input, shape index: {}]
  %s3 = inlined_call_operand.vmem [shape: f32[1,32], index: 3, kind: input, shape index: {}]
  %s4 = inlined_call_operand.vmem [shape: f32[128,32], index: 4, kind: output, shape index: {0}]
  %s5 = inlined_call_operand.vmem [shape: f32[128,1], index: 5, kind: output, shape index: {1}]
  %6 = xla_tuple %s4, %s5
  %s7 = sld [smem:[#allocation0]]
  $region38: #{tpu_custom_call.1} parent=0
    _
  %s9 = ssub.s32 1, %s7
  %s10 = scalar_select 0, %s9, %s7
  $region1: #{tpu_custom_call.1} parent=0
    #allocation2 [shape = 'u8[512]{0}', space=smem, size = 0x200, scoped, tag = 'input window, operand 0, single buffered']
    #allocation3 [shape = 's32[1]{0}', space=sflag, size = 0x4, scoped, tag = 'scoped memory for tpu_custom_call.1']
    %11 = vsyncpa [#allocation3], 0
    // Predicated region
    $region2: #{tpu_custom_call.1} parent=1 // pred_check
      _
    $region3: #{tpu_custom_call.1} parent=1 // pred_check_branch
      %13 = sbr.rel (0) target = $region5
    $region4: #{tpu_custom_call.1} parent=1 // pred_region
      %s15 = ssub.s32 16, 16
      %16 = vsyncadd [#allocation3], %s15
      %s18 = sshll.u32 %s0, 4
      %s19 = int_to_ptr.vmem [resolvable:$true] %s18
      %21 = dma.vmem_to_smem %s19, 16, [#allocation2], [#allocation3]
    $region5: #{tpu_custom_call.1} parent=1 // pred_fallthru
      _
    // Predicated region
    $region6: #{tpu_custom_call.1} parent=1 // pred_check
      _
    $region7: #{tpu_custom_call.1} parent=1 // pred_check_branch
      %23 = sbr.rel (0) target = $region9
    $region8: #{tpu_custom_call.1} parent=1 // pred_region
      _
    $region9: #{tpu_custom_call.1} parent=1 // pred_fallthru
      _
    // Predicated region
    $region10: #{tpu_custom_call.1} parent=1 // pred_check
      _
    $region11: #{tpu_custom_call.1} parent=1 // pred_check_branch
      %25 = sbr.rel (0) target = $region13
    $region12: #{tpu_custom_call.1} parent=1 // pred_region
      _
    $region13: #{tpu_custom_call.1} parent=1 // pred_fallthru
      _
    // Predicated region
    $region14: #{tpu_custom_call.1} parent=1 // pred_check
      _
    $region15: #{tpu_custom_call.1} parent=1 // pred_check_branch
      %27 = sbr.rel (0) target = $region17
    $region16: #{tpu_custom_call.1} parent=1 // pred_region
      _
    $region17: #{tpu_custom_call.1} parent=1 // pred_fallthru
      _
    // Predicated region
    $region18: #{tpu_custom_call.1} parent=1 // pred_check
      _
    $region19: #{tpu_custom_call.1} parent=1 // pred_check_branch
      %29 = sbr.rel (0) target = $region21
    $region20: #{tpu_custom_call.1} parent=1 // pred_region
      %30 = dma.done [#allocation3], 16
    $region21: #{tpu_custom_call.1} parent=1 // pred_fallthru
      _
    %31 = sfence
    %s32 = sld [smem:[#allocation2]]
    %s33 = sld [smem:[#allocation2 + $0x1]]
    %v34 = vld [vmem:[%s1] sm:$0xff]
    %v35 = vld [vmem:[%s1 + $0x8] sm:$0xff]
    %v36 = vld [vmem:[%s1 + $0x10] sm:$0xff]
    %v37 = vld [vmem:[%s1 + $0x18] sm:$0xff]
    %v38 = vld [vmem:[%s1 + $0x20] sm:$0xff]
    %v39 = vld [vmem:[%s1 + $0x28] sm:$0xff]
    %v40 = vld [vmem:[%s1 + $0x30] sm:$0xff]
    %v41 = vld [vmem:[%s1 + $0x38] sm:$0xff]
    %v42 = vld [vmem:[%s1 + $0x40] sm:$0xff]
    %v43 = vld [vmem:[%s1 + $0x48] sm:$0xff]
    %v44 = vld [vmem:[%s1 + $0x50] sm:$0xff]
    %v45 = vld [vmem:[%s1 + $0x58] sm:$0xff]
    %v46 = vld [vmem:[%s1 + $0x60] sm:$0xff]
    %v47 = vld [vmem:[%s1 + $0x68] sm:$0xff]
    %v48 = vld [vmem:[%s1 + $0x70] sm:$0xff]
    %v49 = vld [vmem:[%s1 + $0x78] sm:$0xff]
    %v50 = vld [vmem:[%s2] sm:$0x1]
    %v51 = vld [vmem:[%s3] sm:$0x1]
    %v53 = vlaneseq
    %v54 = vshrl.u32 %v53, 7
    %v55 = vsub.s32 0, %v54
    %v56 = vrot.slane %v50, %v55
    %v58 = vmul.f32 %v34, %v56
    %v59 = vmul.f32 %v35, %v56
    %v60 = vmul.f32 %v36, %v56
    %v61 = vmul.f32 %v37, %v56
    %v62 = vmul.f32 %v38, %v56
    %v63 = vmul.f32 %v39, %v56
    %v64 = vmul.f32 %v40, %v56
    %v65 = vmul.f32 %v41, %v56
    %v66 = vmul.f32 %v42, %v56
    %v67 = vmul.f32 %v43, %v56
    %v68 = vmul.f32 %v44, %v56
    %v69 = vmul.f32 %v45, %v56
    %v70 = vmul.f32 %v46, %v56
    %v71 = vmul.f32 %v47, %v56
    %v72 = vmul.f32 %v48, %v56
    %v73 = vmul.f32 %v49, %v56
    %vm74 = vcmask 261120
    %v75 = vsel %vm74, %v58, 0.0
    %76 = vadd.xlane.f32.xlu0 %v75
    %v77 = vpop.xlane.xlu0 %76
    %v78 = vsel %vm74, %v59, 0.0
    %79 = vadd.xlane.f32.xlu0 %v78
    %v80 = vpop.xlane.xlu0 %79
    %v81 = vsel %vm74, %v60, 0.0
    %82 = vadd.xlane.f32.xlu0 %v81
    %v83 = vpop.xlane.xlu0 %82
    %v84 = vsel %vm74, %v61, 0.0
    %85 = vadd.xlane.f32.xlu0 %v84
    %v86 = vpop.xlane.xlu0 %85
    %v87 = vsel %vm74, %v62, 0.0
    %88 = vadd.xlane.f32.xlu0 %v87
    %v89 = vpop.xlane.xlu0 %88
    %v90 = vsel %vm74, %v63, 0.0
    %91 = vadd.xlane.f32.xlu0 %v90
    %v92 = vpop.xlane.xlu0 %91
    %v93 = vsel %vm74, %v64, 0.0
    %94 = vadd.xlane.f32.xlu0 %v93
    %v95 = vpop.xlane.xlu0 %94
    %v96 = vsel %vm74, %v65, 0.0
    %97 = vadd.xlane.f32.xlu0 %v96
    %v98 = vpop.xlane.xlu0 %97
    %v99 = vsel %vm74, %v66, 0.0
    %100 = vadd.xlane.f32.xlu0 %v99
    %v101 = vpop.xlane.xlu0 %100
    %v102 = vsel %vm74, %v67, 0.0
    %103 = vadd.xlane.f32.xlu0 %v102
    %v104 = vpop.xlane.xlu0 %103
    %v105 = vsel %vm74, %v68, 0.0
    %106 = vadd.xlane.f32.xlu0 %v105
    %v107 = vpop.xlane.xlu0 %106
    %v108 = vsel %vm74, %v69, 0.0
    %109 = vadd.xlane.f32.xlu0 %v108
    %v110 = vpop.xlane.xlu0 %109
    %v111 = vsel %vm74, %v70, 0.0
    %112 = vadd.xlane.f32.xlu0 %v111
    %v113 = vpop.xlane.xlu0 %112
    %v114 = vsel %vm74, %v71, 0.0
    %115 = vadd.xlane.f32.xlu0 %v114
    %v116 = vpop.xlane.xlu0 %115
    %v117 = vsel %vm74, %v72, 0.0
    %118 = vadd.xlane.f32.xlu0 %v117
    %v119 = vpop.xlane.xlu0 %118
    %v120 = vsel %vm74, %v73, 0.0
    %121 = vadd.xlane.f32.xlu0 %v120
    %v122 = vpop.xlane.xlu0 %121
    %v123 = vstv %s32
    %v124 = vadd.f32 %v77, %v123
    %v125 = vadd.f32 %v80, %v123
    %v126 = vadd.f32 %v83, %v123
    %v127 = vadd.f32 %v86, %v123
    %v128 = vadd.f32 %v89, %v123
    %v129 = vadd.f32 %v92, %v123
    %v130 = vadd.f32 %v95, %v123
    %v131 = vadd.f32 %v98, %v123
    %v132 = vadd.f32 %v101, %v123
    %v133 = vadd.f32 %v104, %v123
    %v134 = vadd.f32 %v107, %v123
    %v135 = vadd.f32 %v110, %v123
    %v136 = vadd.f32 %v113, %v123
    %v137 = vadd.f32 %v116, %v123
    %v138 = vadd.f32 %v119, %v123
    %v139 = vadd.f32 %v122, %v123
    %v140 = vtanh.pop %v124
    %v141 = vtanh.pop %v125
    %v142 = vtanh.pop %v126
    %v143 = vtanh.pop %v127
    %v144 = vtanh.pop %v128
    %v145 = vtanh.pop %v129
    %v146 = vtanh.pop %v130
    %v147 = vtanh.pop %v131
    %v148 = vtanh.pop %v132
    %v149 = vtanh.pop %v133
    %v150 = vtanh.pop %v134
    %v151 = vtanh.pop %v135
    %v152 = vtanh.pop %v136
    %v153 = vtanh.pop %v137
    %v154 = vtanh.pop %v138
    %v155 = vtanh.pop %v139
    %v157 = vlaneseq
    %v158 = vshrl.u32 %v157, 7
    %v159 = vsub.s32 0, %v158
    %v160 = vrot.slane %v51, %v159
    %v162 = vmul.f32 %v160, %v140
    %v163 = vmul.f32 %v160, %v141
    %v164 = vmul.f32 %v160, %v142
    %v165 = vmul.f32 %v160, %v143
    %v166 = vmul.f32 %v160, %v144
    %v167 = vmul.f32 %v160, %v145
    %v168 = vmul.f32 %v160, %v146
    %v169 = vmul.f32 %v160, %v147
    %v170 = vmul.f32 %v160, %v148
    %v171 = vmul.f32 %v160, %v149
    %v172 = vmul.f32 %v160, %v150
    %v173 = vmul.f32 %v160, %v151
    %v174 = vmul.f32 %v160, %v152
    %v175 = vmul.f32 %v160, %v153
    %v176 = vmul.f32 %v160, %v154
    %v177 = vmul.f32 %v160, %v155
    %v178 = vadd.f32 %v34, %v162
    %v179 = vadd.f32 %v35, %v163
    %v180 = vadd.f32 %v36, %v164
    %v181 = vadd.f32 %v37, %v165
    %v182 = vadd.f32 %v38, %v166
    %v183 = vadd.f32 %v39, %v167
    %v184 = vadd.f32 %v40, %v168
    %v185 = vadd.f32 %v41, %v169
    %v186 = vadd.f32 %v42, %v170
    %v187 = vadd.f32 %v43, %v171
    %v188 = vadd.f32 %v44, %v172
    %v189 = vadd.f32 %v45, %v173
    %v190 = vadd.f32 %v46, %v174
    %v191 = vadd.f32 %v47, %v175
    %v192 = vadd.f32 %v48, %v176
    %v193 = vadd.f32 %v49, %v177
    %194 = vst.msk [vmem:[%s4] sm:$0xff] %vm74, %v178
    %195 = vst.msk [vmem:[%s4 + $0x8] sm:$0xff] %vm74, %v179
    %196 = vst.msk [vmem:[%s4 + $0x10] sm:$0xff] %vm74, %v180
    %197 = vst.msk [vmem:[%s4 + $0x18] sm:$0xff] %vm74, %v181
    %198 = vst.msk [vmem:[%s4 + $0x20] sm:$0xff] %vm74, %v182
    %199 = vst.msk [vmem:[%s4 + $0x28] sm:$0xff] %vm74, %v183
    %200 = vst.msk [vmem:[%s4 + $0x30] sm:$0xff] %vm74, %v184
    %201 = vst.msk [vmem:[%s4 + $0x38] sm:$0xff] %vm74, %v185
    %202 = vst.msk [vmem:[%s4 + $0x40] sm:$0xff] %vm74, %v186
    %203 = vst.msk [vmem:[%s4 + $0x48] sm:$0xff] %vm74, %v187
    %204 = vst.msk [vmem:[%s4 + $0x50] sm:$0xff] %vm74, %v188
    %205 = vst.msk [vmem:[%s4 + $0x58] sm:$0xff] %vm74, %v189
    %206 = vst.msk [vmem:[%s4 + $0x60] sm:$0xff] %vm74, %v190
    %207 = vst.msk [vmem:[%s4 + $0x68] sm:$0xff] %vm74, %v191
    %208 = vst.msk [vmem:[%s4 + $0x70] sm:$0xff] %vm74, %v192
    %209 = vst.msk [vmem:[%s4 + $0x78] sm:$0xff] %vm74, %v193
    %v210 = vmul.f32 %v140, %v140
    %v211 = vmul.f32 %v141, %v141
    %v212 = vmul.f32 %v142, %v142
    %v213 = vmul.f32 %v143, %v143
    %v214 = vmul.f32 %v144, %v144
    %v215 = vmul.f32 %v145, %v145
    %v216 = vmul.f32 %v146, %v146
    %v217 = vmul.f32 %v147, %v147
    %v218 = vmul.f32 %v148, %v148
    %v219 = vmul.f32 %v149, %v149
    %v220 = vmul.f32 %v150, %v150
    %v221 = vmul.f32 %v151, %v151
    %v222 = vmul.f32 %v152, %v152
    %v223 = vmul.f32 %v153, %v153
    %v224 = vmul.f32 %v154, %v154
    %v225 = vmul.f32 %v155, %v155
    %v226 = vsub.f32 1.0, %v210
    %v227 = vsub.f32 1.0, %v211
    %v228 = vsub.f32 1.0, %v212
    %v229 = vsub.f32 1.0, %v213
    %v230 = vsub.f32 1.0, %v214
    %v231 = vsub.f32 1.0, %v215
    %v232 = vsub.f32 1.0, %v216
    %v233 = vsub.f32 1.0, %v217
    %v234 = vsub.f32 1.0, %v218
    %v235 = vsub.f32 1.0, %v219
    %v236 = vsub.f32 1.0, %v220
    %v237 = vsub.f32 1.0, %v221
    %v238 = vsub.f32 1.0, %v222
    %v239 = vsub.f32 1.0, %v223
    %v240 = vsub.f32 1.0, %v224
    %v241 = vsub.f32 1.0, %v225
    %v242 = vstv %s33
    %v243 = vmul.f32 %v226, %v242
    %v244 = vmul.f32 %v227, %v242
    %v245 = vmul.f32 %v228, %v242
    %v246 = vmul.f32 %v229, %v242
    %v247 = vmul.f32 %v230, %v242
    %v248 = vmul.f32 %v231, %v242
    %v249 = vmul.f32 %v232, %v242
    %v250 = vmul.f32 %v233, %v242
    %v251 = vmul.f32 %v234, %v242
    %v252 = vmul.f32 %v235, %v242
    %v253 = vmul.f32 %v236, %v242
    %v254 = vmul.f32 %v237, %v242
    %v255 = vmul.f32 %v238, %v242
    %v256 = vmul.f32 %v239, %v242
    %v257 = vmul.f32 %v240, %v242
    %v258 = vmul.f32 %v241, %v242
    %v259 = vadd.f32 %v243, 1.0
    %v260 = vadd.f32 %v244, 1.0
    %v261 = vadd.f32 %v245, 1.0
    %v262 = vadd.f32 %v246, 1.0
    %v263 = vadd.f32 %v247, 1.0
    %v264 = vadd.f32 %v248, 1.0
    %v265 = vadd.f32 %v249, 1.0
    %v266 = vadd.f32 %v250, 1.0
    %v267 = vadd.f32 %v251, 1.0
    %v268 = vadd.f32 %v252, 1.0
    %v269 = vadd.f32 %v253, 1.0
    %v270 = vadd.f32 %v254, 1.0
    %v271 = vadd.f32 %v255, 1.0
    %v272 = vadd.f32 %v256, 1.0
    %v273 = vadd.f32 %v257, 1.0
    %v274 = vadd.f32 %v258, 1.0
    %v275 = vand.u32 2147483647, %v259
    %v276 = vand.u32 2147483647, %v260
    %v277 = vand.u32 2147483647, %v261
    %v278 = vand.u32 2147483647, %v262
    %v279 = vand.u32 2147483647, %v263
    %v280 = vand.u32 2147483647, %v264
    %v281 = vand.u32 2147483647, %v265
    %v282 = vand.u32 2147483647, %v266
    %v283 = vand.u32 2147483647, %v267
    %v284 = vand.u32 2147483647, %v268
    %v285 = vand.u32 2147483647, %v269
    %v286 = vand.u32 2147483647, %v270
    %v287 = vand.u32 2147483647, %v271
    %v288 = vand.u32 2147483647, %v272
    %v289 = vand.u32 2147483647, %v273
    %v290 = vand.u32 2147483647, %v274
    %v291 = vadd.f32 %v275, 0.0001
    %v292 = vadd.f32 %v276, 0.0001
    %v293 = vadd.f32 %v277, 0.0001
    %v294 = vadd.f32 %v278, 0.0001
    %v295 = vadd.f32 %v279, 0.0001
    %v296 = vadd.f32 %v280, 0.0001
    %v297 = vadd.f32 %v281, 0.0001
    %v298 = vadd.f32 %v282, 0.0001
    %v299 = vadd.f32 %v283, 0.0001
    %v300 = vadd.f32 %v284, 0.0001
    %v301 = vadd.f32 %v285, 0.0001
    %v302 = vadd.f32 %v286, 0.0001
    %v303 = vadd.f32 %v287, 0.0001
    %v304 = vadd.f32 %v288, 0.0001
    %v305 = vadd.f32 %v289, 0.0001
    %v306 = vadd.f32 %v290, 0.0001
    %v307 = vlog2.pop %v291
    %v308 = vmul.f32 %v307, 0.6931472
    %v309 = vlog2.pop %v292
    %v310 = vmul.f32 %v309, 0.6931472
    %v311 = vlog2.pop %v293
    %v312 = vmul.f32 %v311, 0.6931472
    %v313 = vlog2.pop %v294
    %v314 = vmul.f32 %v313, 0.6931472
    %v315 = vlog2.pop %v295
    %v316 = vmul.f32 %v315, 0.6931472
    %v317 = vlog2.pop %v296
    %v318 = vmul.f32 %v317, 0.6931472
    %v319 = vlog2.pop %v297
    %v320 = vmul.f32 %v319, 0.6931472
    %v321 = vlog2.pop %v298
    %v322 = vmul.f32 %v321, 0.6931472
    %v323 = vlog2.pop %v299
    %v324 = vmul.f32 %v323, 0.6931472
    %v325 = vlog2.pop %v300
    %v326 = vmul.f32 %v325, 0.6931472
    %v327 = vlog2.pop %v301
    %v328 = vmul.f32 %v327, 0.6931472
    %v329 = vlog2.pop %v302
    %v330 = vmul.f32 %v329, 0.6931472
    %v331 = vlog2.pop %v303
    %v332 = vmul.f32 %v331, 0.6931472
    %v333 = vlog2.pop %v304
    %v334 = vmul.f32 %v333, 0.6931472
    %v335 = vlog2.pop %v305
    %v336 = vmul.f32 %v335, 0.6931472
    %v337 = vlog2.pop %v306
    %v338 = vmul.f32 %v337, 0.6931472
    %vm339 = vcmask 7168
    %340 = vst.msk [vmem:[%s5] sm:$0xff] %vm339, %v308
    %341 = vst.msk [vmem:[%s5 + $0x8] sm:$0xff] %vm339, %v310
    %342 = vst.msk [vmem:[%s5 + $0x10] sm:$0xff] %vm339, %v312
    %343 = vst.msk [vmem:[%s5 + $0x18] sm:$0xff] %vm339, %v314
    %344 = vst.msk [vmem:[%s5 + $0x20] sm:$0xff] %vm339, %v316
    %345 = vst.msk [vmem:[%s5 + $0x28] sm:$0xff] %vm339, %v318
    %346 = vst.msk [vmem:[%s5 + $0x30] sm:$0xff] %vm339, %v320
    %347 = vst.msk [vmem:[%s5 + $0x38] sm:$0xff] %vm339, %v322
    %348 = vst.msk [vmem:[%s5 + $0x40] sm:$0xff] %vm339, %v324
    %349 = vst.msk [vmem:[%s5 + $0x48] sm:$0xff] %vm339, %v326
    %350 = vst.msk [vmem:[%s5 + $0x50] sm:$0xff] %vm339, %v328
    %351 = vst.msk [vmem:[%s5 + $0x58] sm:$0xff] %vm339, %v330
    %352 = vst.msk [vmem:[%s5 + $0x60] sm:$0xff] %vm339, %v332
    %353 = vst.msk [vmem:[%s5 + $0x68] sm:$0xff] %vm339, %v334
    %354 = vst.msk [vmem:[%s5 + $0x70] sm:$0xff] %vm339, %v336
    %355 = vst.msk [vmem:[%s5 + $0x78] sm:$0xff] %vm339, %v338
    // Predicated region
    $region22: #{tpu_custom_call.1} parent=1 // pred_check
      _
    $region23: #{tpu_custom_call.1} parent=1 // pred_check_branch
      %357 = sbr.rel (0) target = $region25
    $region24: #{tpu_custom_call.1} parent=1 // pred_region
      _
    $region25: #{tpu_custom_call.1} parent=1 // pred_fallthru
      _
    // Predicated region
    $region26: #{tpu_custom_call.1} parent=1 // pred_check
      _
    $region27: #{tpu_custom_call.1} parent=1 // pred_check_branch
      %359 = sbr.rel (0) target = $region29
    $region28: #{tpu_custom_call.1} parent=1 // pred_region
      _
    $region29: #{tpu_custom_call.1} parent=1 // pred_fallthru
      _
    // Predicated region
    $region30: #{tpu_custom_call.1} parent=1 // pred_check
      _
    $region31: #{tpu_custom_call.1} parent=1 // pred_check_branch
      %361 = sbr.rel (0) target = $region33
    $region32: #{tpu_custom_call.1} parent=1 // pred_region
      _
    $region33: #{tpu_custom_call.1} parent=1 // pred_fallthru
      _
    // Predicated region
    $region34: #{tpu_custom_call.1} parent=1 // pred_check
      _
    $region35: #{tpu_custom_call.1} parent=1 // pred_check_branch
      %363 = sbr.rel (0) target = $region37
    $region36: #{tpu_custom_call.1} parent=1 // pred_region
      _
    $region37: #{tpu_custom_call.1} parent=1 // pred_fallthru
      _
    %364 = vsyncpa [#allocation3], 1

</llo_original>
